<compile_context>
chip_gen: v6e
topology: v6e:2x2x1
jax: 0.10.0
libtpu: 0.0.40
codegen_flags: <defaults>
</compile_context>

<pallas_src>
import jax
import jax.numpy as jnp
from jax.experimental import pallas as pl
from jax.experimental.pallas import tpu as pltpu


def _embed_kernel_full(patches_ref, w_ref, cls_ref, fused_ref, o_ref):
    # patches_ref: (1, N, K) bf16   raw patches (no zero CLS row)
    # w_ref:       (K, H)    bf16   flattened conv weight (VMEM-resident)
    # cls_ref:     (1, H)    bf16   cls_token + pos[0]
    # fused_ref:   (N, H)    bf16   pos[1:]  + conv_bias
    # o_ref:       (1, R, H)        output tile, R = N + 1
    emb = jnp.dot(patches_ref[0], w_ref[...],
                  preferred_element_type=jnp.float32)            # MXU, f32 accum
    o_ref[0, 0:1, :] = cls_ref[...].astype(o_ref.dtype)          # CLS row
    o_ref[0, 1:, :] = (emb + fused_ref[...].astype(jnp.float32)
                       ).astype(o_ref.dtype)                     # patch rows


def _embed_kernel_tiled(patches_ref, w_ref, fused_ref, o_ref):
    # patches_ref: (1, rb, K) bf16  (row 0 of the full array is an all-zero CLS row)
    # fused_ref:   (rb, H)    bf16  fused (cls | conv-bias) + position embeddings
    # o_ref:       (1, rb, H)
    emb = jnp.dot(patches_ref[0], w_ref[...],
                  preferred_element_type=jnp.float32)
    o_ref[0] = (emb + fused_ref[...].astype(jnp.float32)).astype(o_ref.dtype)


def dinov2_embeddings(pixel_values, conv_w, conv_b, cls_token, pos_emb, *,
                      patch_size, row_block=None, out_dtype=jnp.bfloat16,
                      vmem_limit_bytes=None):
    """Pallas implementation of Dinov2Embeddings.forward.

    pixel_values: (B, C, H, W)          NCHW
    conv_w:       (hidden, C, p, p)     PyTorch Conv2d OIHW layout
    conv_b:       (hidden,)
    cls_token:    (1, 1, hidden)
    pos_emb:      (1, N+1, hidden)
    returns:      (B, N+1, hidden) in out_dtype (default bf16)

    row_block=None  -> one whole image per grid step (recommended on v5e/v6e).
    row_block=int   -> tile the sequence dim (multiple of 8; e.g. 512 on v7x).
    """
    B, C, H, W = pixel_values.shape
    p = patch_size
    hidden = conv_w.shape[0]
    nh, nw = H // p, W // p
    N = nh * nw
    K = C * p * p
    R = N + 1

    # --- patch extraction in bf16, matching Conv2d's (C, kh, kw) traversal ---
    x = pixel_values.astype(jnp.bfloat16)
    patches = (x.reshape(B, C, nh, p, nw, p)
                .transpose(0, 2, 4, 1, 3, 5)
                .reshape(B, N, K))                                   # (B, N, K)

    # Conv2d weight (O, I, kh, kw) -> (K, hidden), bf16 for the MXU.
    w_flat = conv_w.reshape(hidden, K).T.astype(jnp.bfloat16)        # (K, H)

    # Fused additive tables (computed in f32, stored bf16 -> half the DMA):
    #   cls_row     = cls_token + pos[0]
    #   fused_patch = pos[1:]   + conv_bias
    pos = pos_emb.reshape(R, hidden).astype(jnp.float32)
    cls_row = (pos[0:1] + cls_token.reshape(1, hidden).astype(jnp.float32)
               ).astype(jnp.bfloat16)                                # (1, H)
    fused_patch = (pos[1:] + conv_b.reshape(1, hidden).astype(jnp.float32)
                   ).astype(jnp.bfloat16)                            # (N, H)

    if row_block is None:
        # -------- full-image blocks: grid (B,) ---------------------------
        if vmem_limit_bytes is None:
            vmem_limit_bytes = 64 * 1024 * 1024
        grid_spec = pltpu.PrefetchScalarGridSpec(
            num_scalar_prefetch=0,
            grid=(B,),
            in_specs=[
                pl.BlockSpec((1, N, K), lambda b: (b, 0, 0)),         # patches
                pl.BlockSpec((K, hidden), lambda b: (0, 0)),          # weight (resident)
                pl.BlockSpec((1, hidden), lambda b: (0, 0)),          # cls row (resident)
                pl.BlockSpec((N, hidden), lambda b: (0, 0)),          # fused (resident)
            ],
            out_specs=pl.BlockSpec((1, R, hidden), lambda b: (b, 0, 0)),
        )
        kernel = _embed_kernel_full
        operands = (patches, w_flat, cls_row, fused_patch)
        dims = ("parallel",)                  # batch parallel -> v7x 2-TC sharding
    else:
        # -------- row-tiled blocks: grid (row_tiles, B) -------------------
        # Zero CLS patch row keeps every store fully aligned; fused table gets
        # the cls row at index 0.  Grid order (t, b) keeps the fused block
        # index constant over the inner batch loop (no per-step re-fetch).
        if vmem_limit_bytes is None:
            vmem_limit_bytes = 48 * 1024 * 1024
        assert row_block % 8 == 0 or row_block >= R, "row_block must be a multiple of 8"
        patches_r = jnp.concatenate(
            [jnp.zeros((B, 1, K), jnp.bfloat16), patches], axis=1)    # (B, R, K)
        fused_full = jnp.concatenate([cls_row, fused_patch], axis=0)  # (R, H) bf16
        n_row_tiles = pl.cdiv(R, row_block)
        grid_spec = pltpu.PrefetchScalarGridSpec(
            num_scalar_prefetch=0,
            grid=(n_row_tiles, B),
            in_specs=[
                pl.BlockSpec((1, row_block, K), lambda t, b: (b, t, 0)),
                pl.BlockSpec((K, hidden), lambda t, b: (0, 0)),        # resident
                pl.BlockSpec((row_block, hidden), lambda t, b: (t, 0)),  # resident per tile
            ],
            out_specs=pl.BlockSpec((1, row_block, hidden), lambda t, b: (b, t, 0)),
        )
        kernel = _embed_kernel_tiled
        operands = (patches_r, w_flat, fused_full)
        dims = ("arbitrary", "parallel")      # batch stays parallel for v7x cores

    return pl.pallas_call(
        kernel,
        out_shape=jax.ShapeDtypeStruct((B, R, hidden), out_dtype),
        grid_spec=grid_spec,
        compiler_params=pltpu.CompilerParams(
            dimension_semantics=dims,
            vmem_limit_bytes=vmem_limit_bytes),
    )(*operands)


def _reference(pixel_values, conv_w, conv_b, cls_token, pos_emb, *, patch_size):
    """Pure-JAX reference mirroring the PyTorch forward (real conv), f32 output.

    Uses the same bf16 operand cast + f32 accumulation as the kernel so the
    comparison is apples-to-apples.
    """
    B = pixel_values.shape[0]
    hidden = conv_w.shape[0]
    p = patch_size
    y = jax.lax.conv_general_dilated(
        pixel_values.astype(jnp.bfloat16), conv_w.astype(jnp.bfloat16),
        window_strides=(p, p), padding="VALID",
        dimension_numbers=("NCHW", "OIHW", "NCHW"),
        preferred_element_type=jnp.float32)
    y = y + conv_b[None, :, None, None].astype(jnp.float32)
    Bn, Hd, gh, gw = y.shape
    emb = y.reshape(Bn, Hd, gh * gw).transpose(0, 2, 1)              # flatten(2).T
    cls = jnp.broadcast_to(cls_token.astype(jnp.float32), (B, 1, hidden))
    return jnp.concatenate([cls, emb], axis=1) + pos_emb.astype(jnp.float32)


if __name__ == "__main__":
    # Small shapes consistent with the module structure:
    #   hidden_size=32, image_size=16, patch_size=4, num_channels=3, batch=2
    #   -> num_patches = (16 // 4) ** 2 = 16, seq = 17
    B, C, IMG, P, HID = 2, 3, 16, 4, 32
    N = (IMG // P) ** 2

    key = jax.random.PRNGKey(0)
    k_x, k_w, k_b, k_cls, k_pos = jax.random.split(key, 5)

    pixel_values = jax.random.normal(k_x, (B, C, IMG, IMG), dtype=jnp.float32)

    # Deterministic synthetic parameters (shapes match module __init__).
    conv_w = jax.random.normal(k_w, (HID, C, P, P), dtype=jnp.float32) * 0.02
    conv_b = jax.random.normal(k_b, (HID,), dtype=jnp.float32) * 0.02
    cls_token = jax.random.normal(k_cls, (1, 1, HID), dtype=jnp.float32)
    mask_token = jnp.zeros((1, HID), dtype=jnp.float32)   # parameter unused in forward
    pos_emb = jax.random.normal(k_pos, (1, N + 1, HID), dtype=jnp.float32)

    ref = _reference(pixel_values, conv_w, conv_b, cls_token, pos_emb,
                     patch_size=P)

    # Default (full-image) path and row-tiled (v7x-style) path.
    out_full = jax.block_until_ready(
        dinov2_embeddings(pixel_values, conv_w, conv_b, cls_token, pos_emb,
                          patch_size=P))
    out_tiled = jax.block_until_ready(
        dinov2_embeddings(pixel_values, conv_w, conv_b, cls_token, pos_emb,
                          patch_size=P, row_block=8))

    assert out_full.shape == (B, N + 1, HID), out_full.shape
    assert out_tiled.shape == (B, N + 1, HID), out_tiled.shape
    assert out_full.dtype == jnp.bfloat16

    for out in (out_full, out_tiled):
        err = float(jnp.max(jnp.abs(out.astype(jnp.float32) - ref)))
        assert err < 5e-2, err   # bf16 output / bf16 fused-table rounding budget

    print("KERNEL_OK")
</pallas_src>

<mosaic_0001>
module attributes {stable_mosaic.version = 11 : i64} {
  func.func @_embed_kernel_full(%arg0: i32, %arg1: memref<1x16x48xbf16, #tpu.memory_space<vmem>>, %arg2: memref<48x32xbf16, #tpu.memory_space<vmem>>, %arg3: memref<1x32xbf16, #tpu.memory_space<vmem>>, %arg4: memref<16x32xbf16, #tpu.memory_space<vmem>>, %arg5: memref<1x17x32xbf16, #tpu.memory_space<vmem>>) attributes {dimension_semantics = [#tpu.dimension_semantics<parallel>], iteration_bounds = array<i64: 2>, scalar_prefetch = 0 : i64, scratch_operands = 0 : i64, tpu.core_type = #tpu.core_type<tc>, window_params = [{transform_indices = @transform_0, window_bounds = array<i64: 1, 16, 48>}, {pipeline_mode = #tpu.pipeline_mode<synchronous>, transform_indices = @transform_1, window_bounds = array<i64: 48, 32>}, {pipeline_mode = #tpu.pipeline_mode<synchronous>, transform_indices = @transform_2, window_bounds = array<i64: 1, 32>}, {pipeline_mode = #tpu.pipeline_mode<synchronous>, transform_indices = @transform_3, window_bounds = array<i64: 16, 32>}, {transform_indices = @transform_4, window_bounds = array<i64: 1, 17, 32>}]} {
    %c0 = arith.constant 0 : index
    %c0_0 = arith.constant 0 : index
    %c0_1 = arith.constant 0 : index
    %0 = vector.load %arg1[%c0, %c0_0, %c0_1] : memref<1x16x48xbf16, #tpu.memory_space<vmem>>, vector<1x16x48xbf16>
    %1 = vector.shape_cast %0 : vector<1x16x48xbf16> to vector<16x48xbf16>
    %c0_2 = arith.constant 0 : index
    %c0_3 = arith.constant 0 : index
    %2 = vector.load %arg2[%c0_2, %c0_3] : memref<48x32xbf16, #tpu.memory_space<vmem>>, vector<48x32xbf16>
    %cst = arith.constant dense<0.000000e+00> : vector<16x32xf32>
    %3 = tpu.matmul %1, %2, %cst {dimension_numbers = #tpu.dot_dimension_numbers<[1], [0], [0], [1], [0, 0, 1, 1], [], []>} : vector<16x48xbf16>, vector<48x32xbf16>, vector<16x32xf32> -> vector<16x32xf32>
    %c0_4 = arith.constant 0 : index
    %c0_5 = arith.constant 0 : index
    %4 = vector.load %arg3[%c0_4, %c0_5] : memref<1x32xbf16, #tpu.memory_space<vmem>>, vector<1x32xbf16>
    %c0_6 = arith.constant 0 : index
    %c0_7 = arith.constant 0 : index
    %c0_8 = arith.constant 0 : index
    %5 = vector.load %arg5[%c0_6, %c0_7, %c0_8] : memref<1x17x32xbf16, #tpu.memory_space<vmem>>, vector<1x1x32xbf16>
    %6 = vector.shape_cast %5 : vector<1x1x32xbf16> to vector<1x32xbf16>
    %7 = vector.shape_cast %4 : vector<1x32xbf16> to vector<1x1x32xbf16>
    tpu.vector_store %arg5[%c0_6, %c0_7, %c0_8], %7 {strides = array<i32>} : memref<1x17x32xbf16, #tpu.memory_space<vmem>>, vector<1x1x32xbf16>,
    %c0_9 = arith.constant 0 : index
    %c0_10 = arith.constant 0 : index
    %8 = vector.load %arg4[%c0_9, %c0_10] : memref<16x32xbf16, #tpu.memory_space<vmem>>, vector<16x32xbf16>
    %9 = arith.extf %8 : vector<16x32xbf16> to vector<16x32xf32>
    %10 = arith.addf %3, %9 : vector<16x32xf32>
    %11 = arith.truncf %10 : vector<16x32xf32> to vector<16x32xbf16>
    %c0_11 = arith.constant 0 : index
    %c1 = arith.constant 1 : index
    %c0_12 = arith.constant 0 : index
    %12 = vector.load %arg5[%c0_11, %c1, %c0_12] : memref<1x17x32xbf16, #tpu.memory_space<vmem>>, vector<1x16x32xbf16>
    %13 = vector.shape_cast %12 : vector<1x16x32xbf16> to vector<16x32xbf16>
    %14 = vector.shape_cast %11 : vector<16x32xbf16> to vector<1x16x32xbf16>
    tpu.vector_store %arg5[%c0_11, %c1, %c0_12], %14 {strides = array<i32>} : memref<1x17x32xbf16, #tpu.memory_space<vmem>>, vector<1x16x32xbf16>,
    return
  }
  func.func @transform_0(%arg0: i32) -> (i32, i32, i32) {
    %c0_i32 = arith.constant 0 : i32
    %c0_i32_0 = arith.constant 0 : i32
    %c0_i32_1 = arith.constant 0 : i32
    return %arg0, %c0_i32, %c0_i32_0 : i32, i32, i32
  }
  func.func @transform_1(%arg0: i32) -> (i32, i32) {
    %c0_i32 = arith.constant 0 : i32
    %c0_i32_0 = arith.constant 0 : i32
    %c0_i32_1 = arith.constant 0 : i32
    return %c0_i32, %c0_i32_0 : i32, i32
  }
  func.func @transform_2(%arg0: i32) -> (i32, i32) {
    %c0_i32 = arith.constant 0 : i32
    %c0_i32_0 = arith.constant 0 : i32
    %c0_i32_1 = arith.constant 0 : i32
    return %c0_i32, %c0_i32_0 : i32, i32
  }
  func.func @transform_3(%arg0: i32) -> (i32, i32) {
    %c0_i32 = arith.constant 0 : i32
    %c0_i32_0 = arith.constant 0 : i32
    %c0_i32_1 = arith.constant 0 : i32
    return %c0_i32, %c0_i32_0 : i32, i32
  }
  func.func @transform_4(%arg0: i32) -> (i32, i32, i32) {
    %c0_i32 = arith.constant 0 : i32
    %c0_i32_0 = arith.constant 0 : i32
    %c0_i32_1 = arith.constant 0 : i32
    return %arg0, %c0_i32, %c0_i32_0 : i32, i32, i32
  }
}

</mosaic_0001>

<llo_original>
// kernel: tpu_custom_call.1
$region0: #{tpu_custom_call.1}
  #allocation0 [shape = 'u32[]', space=smem, size = 0x4, offset = 0x4, fixed_abs, tag = 'smem constant byte address 0x4 - core index']
  #allocation1 [shape = 'u32[144,128]{1,0:T(1,128)}', space=vmem, size = 0x12000, scoped, tag = 'internal scratch']
  %s0 = inlined_call_operand.vmem [shape: bf16[2,16,48], index: 0, kind: input, shape index: {}]
  %s1 = inlined_call_operand.vmem [shape: bf16[48,32], index: 1, kind: input, shape index: {}]
  %s2 = inlined_call_operand.vmem [shape: bf16[1,32], index: 2, kind: input, shape index: {}]
  %s3 = inlined_call_operand.vmem [shape: bf16[16,32], index: 3, kind: input, shape index: {}]
  %s4 = inlined_call_operand.vmem [shape: bf16[2,17,32], index: 4, kind: output, shape index: {}]
  %s5 = sld [smem:[#allocation0]]
  $region49: #{tpu_custom_call.1} parent=0
    _
  %s7 = ssub.s32 1, %s5
  %s8 = scalar_select 0, %s7, %s5
  loop: start=0, step=1, limit=4
  $region2: #{tpu_custom_call.1} parent=0 // loop_pre_header
    _
  $region3: #{tpu_custom_call.1} parent=0 // loop_header
    %s10 = sphi 0, %s14
    %p11 = scmp.ge.s32.totalorder %s10, 4
    %s20 = sphi 0, %s22
    %s23 = sphi 0, %s20
    %s24 = sphi 0, %s23
    %s40 = sphi 0, %s24
    %s44 = sphi 0, %s44
    %s46 = sphi 0, %s44
    %s47 = sphi 0, %s46
    %s61 = sphi 0, %s47
    %s65 = sphi 0, %s65
    %s67 = sphi 0, %s65
    %s68 = sphi 0, %s67
    %s82 = sphi 0, %s68
    %s86 = sphi 0, %s86
    %s88 = sphi 0, %s86
    %s89 = sphi 0, %s88
    %s103 = sphi 0, %s89
    %s109 = sphi 0, %s111
    %s112 = sphi 0, %s109
    %s113 = sphi 0, %s112
    %s129 = sphi 0, %s113
  $region4: #{tpu_custom_call.1} parent=0 // loop_header_branch
    %13 = sbr.rel (%p11) target = $region8
  $region5: #{tpu_custom_call.1} parent=0 // loop_body
    %s15 = ssub.s32 %s10, 1
    %s16 = ssub.s32 %s10, 2
    %s17 = sadd.s32 %s10, 1
    %s18 = ssub.s32 %s10, %s17
    %p19 = scmp.eq.s32.totalorder %s18, 0
    %s21 = sadd.s32 %s20, 1
    %s22 = scalar_select %p19, %s20, %s21
    %p25 = pneg %p19
    %p26 = scmp.eq.s32.totalorder %s10, 1
    %p27 = por %p25, %p26
    %p28 = scmp.ne.s32.totalorder %s20, %s23
    %p29 = scmp.eq.s32.totalorder %s10, 0
    %p30 = por %p28, %p29
    %p31 = scmp.ne.s32.totalorder %s20, %s23
    %p32 = scmp.eq.s32.totalorder %s15, 1
    %p33 = por %p31, %p32
    %p34 = scmp.ne.s32.totalorder %s23, %s24
    %p35 = scmp.eq.s32.totalorder %s15, 0
    %p36 = por %p34, %p35
    %p37 = scmp.ne.s32.totalorder %s23, %s24
    %p38 = scmp.eq.s32.totalorder %s16, 1
    %p39 = por %p37, %p38
    %p41 = scmp.ne.s32.totalorder %s24, %s40
    %p42 = scmp.eq.s32.totalorder %s16, 0
    %p43 = por %p41, %p42
    %s45 = sadd.s32 %s44, 1
    %p48 = scmp.eq.s32.totalorder %s10, 1
    %p49 = scmp.ne.s32.totalorder %s44, %s46
    %p50 = scmp.eq.s32.totalorder %s10, 0
    %p51 = por %p49, %p50
    %p52 = scmp.ne.s32.totalorder %s44, %s46
    %p53 = scmp.eq.s32.totalorder %s15, 1
    %p54 = por %p52, %p53
    %p55 = scmp.ne.s32.totalorder %s46, %s47
    %p56 = scmp.eq.s32.totalorder %s15, 0
    %p57 = por %p55, %p56
    %p58 = scmp.ne.s32.totalorder %s46, %s47
    %p59 = scmp.eq.s32.totalorder %s16, 1
    %p60 = por %p58, %p59
    %p62 = scmp.ne.s32.totalorder %s47, %s61
    %p63 = scmp.eq.s32.totalorder %s16, 0
    %p64 = por %p62, %p63
    %s66 = sadd.s32 %s65, 1
    %p69 = scmp.eq.s32.totalorder %s10, 1
    %p70 = scmp.ne.s32.totalorder %s65, %s67
    %p71 = scmp.eq.s32.totalorder %s10, 0
    %p72 = por %p70, %p71
    %p73 = scmp.ne.s32.totalorder %s65, %s67
    %p74 = scmp.eq.s32.totalorder %s15, 1
    %p75 = por %p73, %p74
    %p76 = scmp.ne.s32.totalorder %s67, %s68
    %p77 = scmp.eq.s32.totalorder %s15, 0
    %p78 = por %p76, %p77
    %p79 = scmp.ne.s32.totalorder %s67, %s68
    %p80 = scmp.eq.s32.totalorder %s16, 1
    %p81 = por %p79, %p80
    %p83 = scmp.ne.s32.totalorder %s68, %s82
    %p84 = scmp.eq.s32.totalorder %s16, 0
    %p85 = por %p83, %p84
    %s87 = sadd.s32 %s86, 1
    %p90 = scmp.eq.s32.totalorder %s10, 1
    %p91 = scmp.ne.s32.totalorder %s86, %s88
    %p92 = scmp.eq.s32.totalorder %s10, 0
    %p93 = por %p91, %p92
    %p94 = scmp.ne.s32.totalorder %s86, %s88
    %p95 = scmp.eq.s32.totalorder %s15, 1
    %p96 = por %p94, %p95
    %p97 = scmp.ne.s32.totalorder %s88, %s89
    %p98 = scmp.eq.s32.totalorder %s15, 0
    %p99 = por %p97, %p98
    %p100 = scmp.ne.s32.totalorder %s88, %s89
    %p101 = scmp.eq.s32.totalorder %s16, 1
    %p102 = por %p100, %p101
    %p104 = scmp.ne.s32.totalorder %s89, %s103
    %p105 = scmp.eq.s32.totalorder %s16, 0
    %p106 = por %p104, %p105
    %s107 = ssub.s32 %s10, %s17
    %p108 = scmp.eq.s32.totalorder %s107, 0
    %s110 = sadd.s32 %s109, 1
    %s111 = scalar_select %p108, %s109, %s110
    %p114 = pneg %p108
    %p115 = scmp.eq.s32.totalorder %s10, 1
    %p116 = por %p114, %p115
    %p117 = scmp.ne.s32.totalorder %s109, %s112
    %p118 = scmp.eq.s32.totalorder %s10, 0
    %p119 = por %p117, %p118
    %p120 = scmp.ne.s32.totalorder %s109, %s112
    %p121 = scmp.eq.s32.totalorder %s15, 1
    %p122 = por %p120, %p121
    %p123 = scmp.ne.s32.totalorder %s112, %s113
    %p124 = scmp.eq.s32.totalorder %s15, 0
    %p125 = por %p123, %p124
    %p126 = scmp.ne.s32.totalorder %s112, %s113
    %p127 = scmp.eq.s32.totalorder %s16, 1
    %p128 = por %p126, %p127
    %p130 = scmp.ne.s32.totalorder %s113, %s129
    %p131 = scmp.eq.s32.totalorder %s16, 0
    %p132 = por %p130, %p131
    %p133 = scmp.le.s32.totalorder 1, %s10
    %p134 = scmp.lt.s32.totalorder %s10, 3
    %p135 = pnand %p133, %p134
    %p136 = pneg %p135
    // Predicated region
    $region9: #{tpu_custom_call.1} parent=5 // pred_check
      _
    $region10: #{tpu_custom_call.1} parent=5 // pred_check_branch
      %138 = sbr.rel (%p135) target = $region12
    $region11: #{tpu_custom_call.1} parent=5 // pred_region
      %s139 = ssub.s32 %s10, 1
      // Predicated region
      $region13: #{tpu_custom_call.1} parent=11 // pred_check
        %p140 = pneg %p57
      $region14: #{tpu_custom_call.1} parent=11 // pred_check_branch
        %142 = sbr.rel (%p140) target = $region16
      $region15: #{tpu_custom_call.1} parent=11 // pred_region
        _
      $region16: #{tpu_custom_call.1} parent=11 // pred_fallthru
        _
      // Predicated region
      $region17: #{tpu_custom_call.1} parent=11 // pred_check
        %p143 = pneg %p78
      $region18: #{tpu_custom_call.1} parent=11 // pred_check_branch
        %145 = sbr.rel (%p143) target = $region20
      $region19: #{tpu_custom_call.1} parent=11 // pred_region
        _
      $region20: #{tpu_custom_call.1} parent=11 // pred_fallthru
        _
      // Predicated region
      $region21: #{tpu_custom_call.1} parent=11 // pred_check
        %p146 = pneg %p99
      $region22: #{tpu_custom_call.1} parent=11 // pred_check_branch
        %148 = sbr.rel (%p146) target = $region24
      $region23: #{tpu_custom_call.1} parent=11 // pred_region
        _
      $region24: #{tpu_custom_call.1} parent=11 // pred_fallthru
        _
    $region12: #{tpu_custom_call.1} parent=5 // pred_fallthru
      _
    %p149 = scmp.lt.s32.totalorder %s10, 2
    // Predicated region
    $region25: #{tpu_custom_call.1} parent=5 // pred_check
      %p150 = pneg %p149
    $region26: #{tpu_custom_call.1} parent=5 // pred_check_branch
      %152 = sbr.rel (%p150) target = $region28
    $region27: #{tpu_custom_call.1} parent=5 // pred_region
      // Predicated region
      $region29: #{tpu_custom_call.1} parent=27 // pred_check
        %p153 = pneg %p30
      $region30: #{tpu_custom_call.1} parent=27 // pred_check_branch
        %155 = sbr.rel (%p153) target = $region32
      $region31: #{tpu_custom_call.1} parent=27 // pred_region
        %p156 = scmp.lt.s32.totalorder %s10, 1
        %s157 = scalar_select %p156, %s10, 1
        %s158 = smul.addr %s157, 2
        %s159 = smul.addr %s158, 4
        %s160 = scalar_lea.vmem %s0, %s159
      $region32: #{tpu_custom_call.1} parent=27 // pred_fallthru
        _
    $region28: #{tpu_custom_call.1} parent=5 // pred_fallthru
      _
    %p161 = scmp.le.s32.totalorder 1, %s10
    %p162 = scmp.lt.s32.totalorder %s10, 3
    %p163 = pnand %p161, %p162
    %p164 = pneg %p163
    // Predicated region
    $region33: #{tpu_custom_call.1} parent=5 // pred_check
      _
    $region34: #{tpu_custom_call.1} parent=5 // pred_check_branch
      %166 = sbr.rel (%p163) target = $region36
    $region35: #{tpu_custom_call.1} parent=5 // pred_region
      %s167 = ssub.s32 %s10, 1
      %p168 = scmp.lt.s32.totalorder %s15, 1
      %s169 = scalar_select %p168, %s15, 1
      %s170 = smul.addr %s169, 2
      %s171 = smul.addr %s170, 4
      %s172 = scalar_lea.vmem %s0, %s171
      %p173 = pneg %p36
      %p174 = pneg %p33
      %p175 = pneg %p57
      %p176 = pneg %p54
      %p177 = pneg %p78
      %p178 = pneg %p75
      %p179 = pneg %p99
      %p180 = pneg %p96
      %p181 = pneg %p125
      %p182 = pneg %p122
      %p183 = scmp.lt.s32.totalorder %s15, 1
      %s184 = scalar_select %p183, %s15, 1
      %s185 = smul.addr %s184, 3
      %s186 = smul.addr %s185, 4
      %s187 = scalar_lea.vmem %s4, %s186
      %p188 = scmp.lt.s32.totalorder %s15, 1
      %s189 = scalar_select %p188, %s15, 1
      %s190 = smul.addr %s189, 2
      %s191 = smul.addr %s190, 4
      %s192 = scalar_lea.vmem %s0, %s191
      %p193 = scmp.lt.s32.totalorder %s15, 1
      %s194 = scalar_select %p193, %s15, 1
      %s195 = smul.addr %s194, 3
      %s196 = smul.addr %s195, 4
      %s197 = scalar_lea.vmem %s4, %s196
      %v199 = vld [vmem:[%s192] sm:$0xf]
      %v200 = vld [vmem:[%s192 + $0x4] sm:$0xf]
      %v201 = vld [vmem:[%s1] sm:$0xf]
      %v202 = vld [vmem:[%s1 + $0x4] sm:$0xf]
      %v203 = vld [vmem:[%s1 + $0x8] sm:$0xf]
      %v204 = vld [vmem:[%s1 + $0xc] sm:$0xf]
      %v205 = vld [vmem:[%s1 + $0x10] sm:$0xf]
      %v206 = vld [vmem:[%s1 + $0x14] sm:$0xf]
      %v207 = vld [vmem:[%s2] sm:$0x1]
      %vm208 = vcmask 253952
      %vm209 = vsmask.f32 256
      %vm210 = vmand %vm208, %vm209
      %v211 = vld [vmem:[%s197] sm:$0x1]
      %v212 = vsel %vm210, %v207, %v211
      %213 = vst [vmem:[%s197] sm:$0x1] %v212
      %v214 = vld [vmem:[%s3] sm:$0xf]
      %v215 = vld [vmem:[%s3 + $0x4] sm:$0xf]
      %v216 = vunpack.c.l.bf16 %v214
      %v217 = vunpack.c.l.bf16 %v215
      %v220 = vunpack.c.l.b16 %v199
      %v221 = vunpack.c.l.b16 %v200
      %v222 = vpack.c.b16 %v221, %v220
      %v229 = vunpack.c.l.b16 %v201
      %v230 = vunpack.c.l.b16 %v202
      %v231 = vunpack.c.l.b16 %v203
      %v232 = vunpack.c.l.b16 %v204
      %v233 = vunpack.c.l.b16 %v205
      %v234 = vunpack.c.l.b16 %v206
      %v235 = vpack.c.b16 %v230, %v229
      %v236 = vpack.c.b16 %v232, %v231
      %v237 = vpack.c.b16 %v234, %v233
      %vm241 = vcmask 392192
      %v243 = vsel %vm241, %v222, 0
      %245 = vmatprep.subr.bf16.mxu0 0
      %246 = vmatpush1.bf16.msra.mxu0 0
      %247 = vmatprep.subr.bf16.mxu0 0
      %248 = vmatpush1.bf16.msra.mxu0 0
      %249 = vmatprep.subr.bf16.mxu0 0
      %250 = vmatpush1.bf16.msra.mxu0 0
      %251 = vmatprep.subr.bf16.mxu0 0
      %252 = vmatpush1.bf16.msra.mxu0 0
      %253 = vmatprep.subr.bf16.mxu0 0
      %254 = vmatpush1.bf16.msra.mxu0 0
      %255 = vmatprep.subr.bf16.mxu0 0
      %256 = vmatpush1.bf16.msra.mxu0 %v237
      %257 = vmatprep.subr.bf16.mxu0 0
      %258 = vmatpush1.bf16.msra.mxu0 %v236
      %259 = vmatprep.subr.bf16.mxu0 0
      %260 = vmatpush1.bf16.msra.mxu0 %v235
      %261 = vmatprep.subr.bf16.mxu0 0
      %262 = vmatpush2.bf16.msra.mxu0 0
      %263 = vmatprep.subr.bf16.mxu0 0
      %264 = vmatpush2.bf16.msra.mxu0 0
      %265 = vmatprep.subr.bf16.mxu0 0
      %266 = vmatpush2.bf16.msra.mxu0 0
      %267 = vmatprep.subr.bf16.mxu0 0
      %268 = vmatpush2.bf16.msra.mxu0 0
      %269 = vmatprep.subr.bf16.mxu0 0
      %270 = vmatpush2.bf16.msra.mxu0 0
      %271 = vmatprep.subr.bf16.mxu0 0
      %272 = vmatpush2.bf16.msra.mxu0 0
      %273 = vmatprep.subr.bf16.mxu0 0
      %274 = vmatpush2.bf16.msra.mxu0 0
      %275 = vmatprep.subr.bf16.mxu0 0
      %276 = vmatpush2.bf16.msra.mxu0 0
      %277 = vmatprep.mubr.bf16.mxu0 0
      %278 = vmatmul.mubr.bf16.gmra.mxu0 %v243
      %v279 = vpop.f32.mrf.mxu0
      %v280 = vadd.f32 %v216, %v279
      %v281 = vpop.f32.mrf.mxu0
      %v282 = vpop.f32.mrf.mxu0
      %v283 = vadd.f32 %v217, %v282
      %v284 = vpop.f32.mrf.mxu0
      %285 = vdwg.mxu0
      %v286 = vpack.c.bf16 %v283, %v280
      %v288 = vunpack.c.l.b16 %v286
      %v289 = vunpack.c.h.b16 %v286
      %v290 = vpack.c.b16 %v288, %v288
      %v291 = vpack.c.b16 %v289, %v289
      %vm292 = vsmask.f32 4368
      %vm293 = vmor %vm209, %vm292
      %v295 = vshrl.u32 %v290, 16
      %v297 = vrot.slane %v295, 7
      %v298 = vshll.u32 %v290, 16
      %v300 = vor.u32 %v297, %v298
      %v301 = vrot.slane %v297, 4
      %v303 = vshrl.u32 %v291, 16
      %v305 = vrot.slane %v303, 7
      %v306 = vshll.u32 %v291, 16
      %v308 = vor.u32 %v305, %v306
      %v309 = vsel %vm293, %v301, %v308
      %v310 = vrot.slane %v305, 4
      %vm314 = vcmask 257024
      %vm315 = vsmask.f32 7938
      %vm316 = vmand %vm314, %vm315
      %v317 = vld [vmem:[%s197] sm:$0xf]
      %v318 = vsel %vm316, %v300, %v317
      %319 = vst [vmem:[%s197] sm:$0xf] %v318
      %vm320 = vcmask 257024
      %321 = vst.msk [vmem:[%s197 + $0x4] sm:$0xf] %vm320, %v309
      %v322 = vld [vmem:[%s197 + $0x8] sm:$0x1]
      %v323 = vsel %vm210, %v310, %v322
      %324 = vst [vmem:[%s197 + $0x8] sm:$0x1] %v323
      %p325 = scmp.lt.s32.totalorder %s15, 1
      %s326 = scalar_select %p325, %s15, 1
      %s327 = smul.addr %s326, 3
      %s328 = smul.addr %s327, 4
      %s329 = scalar_lea.vmem %s4, %s328
      // Predicated region
      $region37: #{tpu_custom_call.1} parent=35 // pred_check
        %p330 = pneg %p122
      $region38: #{tpu_custom_call.1} parent=35 // pred_check_branch
        %332 = sbr.rel (%p330) target = $region40
      $region39: #{tpu_custom_call.1} parent=35 // pred_region
        _
      $region40: #{tpu_custom_call.1} parent=35 // pred_fallthru
        _
    $region36: #{tpu_custom_call.1} parent=5 // pred_fallthru
      _
    %p333 = scmp.le.s32.totalorder 2, %s10
    // Predicated region
    $region41: #{tpu_custom_call.1} parent=5 // pred_check
      %p334 = pneg %p333
    $region42: #{tpu_custom_call.1} parent=5 // pred_check_branch
      %336 = sbr.rel (%p334) target = $region44
    $region43: #{tpu_custom_call.1} parent=5 // pred_region
      %s337 = ssub.s32 %s10, 2
      // Predicated region
      $region45: #{tpu_custom_call.1} parent=43 // pred_check
        %p338 = pneg %p128
      $region46: #{tpu_custom_call.1} parent=43 // pred_check_branch
        %340 = sbr.rel (%p338) target = $region48
      $region47: #{tpu_custom_call.1} parent=43 // pred_region
        %p341 = scmp.lt.s32.totalorder %s16, 1
        %s342 = scalar_select %p341, %s16, 1
        %s343 = smul.addr %s342, 3
        %s344 = smul.addr %s343, 4
        %s345 = scalar_lea.vmem %s4, %s344
      $region48: #{tpu_custom_call.1} parent=43 // pred_fallthru
        _
    $region44: #{tpu_custom_call.1} parent=5 // pred_fallthru
      _
  $region6: #{tpu_custom_call.1} parent=0 // loop_footer
    %s14 = sadd.s32 1, %s10
  $region7: #{tpu_custom_call.1} parent=0 // loop_footer_branch
    %9 = sbr.rel target = $region3
  $region8: #{tpu_custom_call.1} parent=0 // loop_exit
    _

</llo_original>
